<compile_context>
chip_gen: v5e
topology: v5e:2x2
jax: 0.10.0
libtpu: 0.0.40
codegen_flags: <defaults>
</compile_context>

<pallas_src>
import math
import functools

import jax
import jax.numpy as jnp
from jax.experimental import pallas as pl
from jax.experimental.pallas import tpu as pltpu

_INV_SQRT2 = 1.0 / math.sqrt(2.0)
_F_ALIGN = 256  # MXU-friendly F granularity (2x256 MXU on v6e/v7x; multiple of 128 for v5e)


def _gelu_exact(h):
    # Exact GELU, matches torch.nn.GELU(approximate='none'): 0.5*x*(1+erf(x/sqrt(2)))
    return 0.5 * h * (1.0 + jax.lax.erf(h * _INV_SQRT2))


def _round_up(x, n):
    return ((x + n - 1) // n) * n


def _round_down(x, n):
    return (x // n) * n


@functools.lru_cache(maxsize=1)
def _vmem_budget_bytes():
    """Generation-aware VMEM budget (v5e/v6e: 128 MiB physical, v7x: 64 MiB)."""
    cap = 64 * 1024 * 1024
    try:
        info = pltpu.get_tpu_info()
        cap = int(getattr(info, "vmem_capacity_bytes", cap)) or cap
    except Exception:
        pass
    # leave ~20% headroom for Mosaic internal scratch / pipeline buffers
    return max(32 * 1024 * 1024, min(int(cap * 0.80), 112 * 1024 * 1024))


def _resident_spec(shape, index_map):
    """Single-buffered BlockSpec for blocks whose index never changes across the grid
    (double-buffering them would only waste a second VMEM copy of the weights)."""
    try:
        return pl.BlockSpec(shape, index_map, pipeline_mode=pl.Buffered(1))
    except TypeError:  # older jax without pipeline_mode support
        return pl.BlockSpec(shape, index_map)


# --------------------------------------------------------------------------------------
# Kernels
# --------------------------------------------------------------------------------------
def _ffn_kernel_whole(x_ref, w1_ref, b1_ref, w2_ref, b2_ref, o_ref):
    """Resident weights, whole F in one shot (no scratch)."""
    h = jnp.dot(x_ref[...], w1_ref[...], preferred_element_type=jnp.float32)
    h = _gelu_exact(h + b1_ref[...].astype(jnp.float32))
    out = jnp.dot(h.astype(w2_ref.dtype), w2_ref[...], preferred_element_type=jnp.float32)
    o_ref[...] = (out + b2_ref[...].astype(jnp.float32)).astype(o_ref.dtype)


def _ffn_kernel_chunked(x_ref, w1_ref, b1_ref, w2_ref, b2_ref, o_ref, acc_ref, *, fk, n_fk):
    """Resident weights, F processed in n_fk unrolled chunks of fk (bounds the [tm, F]
    f32 GELU intermediate).  x is read through the ref inside each chunk (not hoisted)."""
    acc_ref[...] = jnp.zeros_like(acc_ref)

    def body(k, carry):
        f0 = pl.multiple_of(k * fk, fk)  # fk is a multiple of 256
        h = jnp.dot(x_ref[...], w1_ref[:, pl.ds(f0, fk)],
                    preferred_element_type=jnp.float32)
        h = _gelu_exact(h + b1_ref[:, pl.ds(f0, fk)].astype(jnp.float32))
        acc_ref[...] += jnp.dot(h.astype(w2_ref.dtype), w2_ref[pl.ds(f0, fk), :],
                                preferred_element_type=jnp.float32)
        return carry

    # unroll -> LLO packer sees the full schedule; GELU/erf of chunk k overlaps the MXU
    # matmul of chunk k+1.
    jax.lax.fori_loop(0, n_fk, body, 0, unroll=True)
    o_ref[...] = (acc_ref[...] + b2_ref[...].astype(jnp.float32)).astype(o_ref.dtype)


def _ffn_kernel_ftiled(x_ref, w1_ref, b1_ref, w2_ref, b2_ref, o_ref, acc_ref):
    """Streamed-weights path: grid = (M tiles, F tiles); W1/W2 slabs are double-buffered
    by the Pallas pipeline, accumulation happens in an f32 VMEM scratch."""
    f = pl.program_id(1)

    @pl.when(f == 0)
    def _():
        acc_ref[...] = jnp.zeros_like(acc_ref)

    h = jnp.dot(x_ref[...], w1_ref[...], preferred_element_type=jnp.float32)
    h = _gelu_exact(h + b1_ref[...].astype(jnp.float32))
    acc_ref[...] += jnp.dot(h.astype(w2_ref.dtype), w2_ref[...],
                            preferred_element_type=jnp.float32)

    @pl.when(f == pl.num_programs(1) - 1)
    def _():
        o_ref[...] = (acc_ref[...] + b2_ref[...].astype(jnp.float32)).astype(o_ref.dtype)


# --------------------------------------------------------------------------------------
# Wrapper
# --------------------------------------------------------------------------------------
@functools.partial(jax.jit,
                   static_argnames=("tm", "max_fk", "tf", "compute_dtype", "force_f_tiling"))
def feed_forward_network(x, w1, b1, w2, b2, *, tm=None, max_fk=2048, tf=None,
                         compute_dtype=None, force_f_tiling=False):
    """x: [..., 2*hidden] -> [..., hidden]

    w1: [2*hidden, ffn]   b1: [ffn]
    w2: [ffn, hidden]     b2: [hidden]

    compute_dtype: MXU operand dtype (e.g. jnp.bfloat16 for the fast path on v6e/v7x).
    Accumulation, bias-add and GELU always run in f32; output keeps x.dtype.
    """
    in_dim = x.shape[-1]
    ffn = w1.shape[1]
    hidden = w2.shape[1]
    lead_shape = x.shape[:-1]
    m = math.prod(lead_shape) if lead_shape else 1

    out_dtype = x.dtype
    cdt = jnp.dtype(compute_dtype) if compute_dtype is not None else jnp.dtype(x.dtype)
    c_item = cdt.itemsize
    o_item = jnp.dtype(out_dtype).itemsize

    x2d = x.reshape(m, in_dim).astype(cdt)
    w1c = w1.astype(cdt)
    w2c = w2.astype(cdt)
    b1_2d = b1.reshape(1, ffn).astype(jnp.float32)
    b2_2d = b2.reshape(1, hidden).astype(jnp.float32)

    budget = _vmem_budget_bytes()

    # ---- row tile: (8,128)-legal, and split so both v7x TensorCores get >=1 tile ----
    if tm is None:
        tm_eff = 256
        while m > 128 and pl.cdiv(m, tm_eff) < 2 and tm_eff > 64:
            tm_eff //= 2
    else:
        tm_eff = tm
    tm_eff = max(1, min(tm_eff, m))
    if tm_eff < m:
        tm_eff = min(m, max(8, _round_down(tm_eff, 8)))
    grid_m = pl.cdiv(m, tm_eff)

    stream_bytes = 2 * tm_eff * in_dim * c_item + 2 * tm_eff * hidden * o_item

    def _resident_path_bytes(ffn_p_, fk_):
        wb = (in_dim * ffn_p_ + ffn_p_ * hidden) * c_item + (ffn_p_ + hidden) * 4
        acc = tm_eff * hidden * 4 if ffn_p_ > fk_ else 0
        interm = tm_eff * fk_ * 4  # f32 GELU intermediate
        return wb + stream_bytes + acc + interm

    # ---- choose resident-weights path (A) vs F-tiled streaming path (B) ----
    use_f_grid = bool(force_f_tiling)
    if not use_f_grid:
        if ffn <= max_fk:
            fk_c, ffn_p = ffn, ffn
        else:
            fk_c = max(_F_ALIGN, _round_down(min(max_fk, ffn), _F_ALIGN))
            ffn_p = _round_up(ffn, fk_c)
        use_f_grid = _resident_path_bytes(ffn_p, fk_c) > budget

    if use_f_grid:
        tf_eff = 512 if tf is None else tf
        tf_eff = max(_F_ALIGN, _round_down(min(tf_eff, _round_up(ffn, _F_ALIGN)), _F_ALIGN))

        def _ftiled_bytes(tf_):
            wtiles = 2 * (in_dim * tf_ + tf_ * hidden) * c_item + 2 * tf_ * 4
            return (wtiles + stream_bytes + tm_eff * hidden * 4
                    + tm_eff * tf_ * 4 + hidden * 4)

        while _ftiled_bytes(tf_eff) > budget and tf_eff > _F_ALIGN:
            tf_eff = max(_F_ALIGN, _round_down(tf_eff // 2, _F_ALIGN))
        ffn_p = _round_up(ffn, tf_eff)
        n_f = ffn_p // tf_eff

    # ---- pad F with zero columns/rows; GELU(0) == 0, so padding contributes nothing ----
    if ffn_p != ffn:
        pad = ffn_p - ffn
        w1c = jnp.pad(w1c, ((0, 0), (0, pad)))
        b1_2d = jnp.pad(b1_2d, ((0, 0), (0, pad)))
        w2c = jnp.pad(w2c, ((0, pad), (0, 0)))

    cost = pl.CostEstimate(
        flops=2 * m * (in_dim * ffn + ffn * hidden),
        transcendentals=m * ffn,
        bytes_accessed=(x2d.size * c_item + w1c.size * c_item + w2c.size * c_item
                        + b1_2d.size * 4 + b2_2d.size * 4 + m * hidden * o_item),
    )
    out_shape = jax.ShapeDtypeStruct((m, hidden), out_dtype)

    if not use_f_grid:
        n_fk = ffn_p // fk_c
        if n_fk == 1:
            kernel = _ffn_kernel_whole
            scratch = []  # no accumulator on the fast path -> VMEM reclaimed
        else:
            kernel = functools.partial(_ffn_kernel_chunked, fk=fk_c, n_fk=n_fk)
            scratch = [pltpu.VMEM((tm_eff, hidden), jnp.float32)]
        out2d = pl.pallas_call(
            kernel,
            out_shape=out_shape,
            grid_spec=pltpu.PrefetchScalarGridSpec(
                num_scalar_prefetch=0,
                grid=(grid_m,),
                in_specs=[
                    pl.BlockSpec((tm_eff, in_dim), lambda i: (i, 0)),       # streamed x rows
                    _resident_spec((in_dim, ffn_p), lambda i: (0, 0)),      # resident W1 (1-buf)
                    _resident_spec((1, ffn_p), lambda i: (0, 0)),           # resident b1 (1-buf)
                    _resident_spec((ffn_p, hidden), lambda i: (0, 0)),      # resident W2 (1-buf)
                    _resident_spec((1, hidden), lambda i: (0, 0)),          # resident b2 (1-buf)
                ],
                out_specs=pl.BlockSpec((tm_eff, hidden), lambda i: (i, 0)),
                scratch_shapes=scratch,
            ),
            compiler_params=pltpu.CompilerParams(
                dimension_semantics=("parallel",),      # independent row tiles -> megacore
                vmem_limit_bytes=budget,
            ),
            cost_estimate=cost,
        )(x2d, w1c, b1_2d, w2c, b2_2d)
    else:
        out2d = pl.pallas_call(
            _ffn_kernel_ftiled,
            out_shape=out_shape,
            grid_spec=pltpu.PrefetchScalarGridSpec(
                num_scalar_prefetch=0,
                grid=(grid_m, n_f),
                in_specs=[
                    pl.BlockSpec((tm_eff, in_dim), lambda i, f: (i, 0)),    # x, constant over F
                    pl.BlockSpec((in_dim, tf_eff), lambda i, f: (0, f)),    # streamed W1 slab
                    pl.BlockSpec((1, tf_eff), lambda i, f: (0, f)),         # streamed b1 slab
                    pl.BlockSpec((tf_eff, hidden), lambda i, f: (f, 0)),    # streamed W2 slab
                    _resident_spec((1, hidden), lambda i, f: (0, 0)),       # resident b2
                ],
                out_specs=pl.BlockSpec((tm_eff, hidden), lambda i, f: (i, 0)),
                scratch_shapes=[pltpu.VMEM((tm_eff, hidden), jnp.float32)],
            ),
            compiler_params=pltpu.CompilerParams(
                dimension_semantics=("parallel", "arbitrary"),
                vmem_limit_bytes=budget,
            ),
            cost_estimate=cost,
        )(x2d, w1c, b1_2d, w2c, b2_2d)

    return out2d.reshape(*lead_shape, hidden)


# --------------------------------------------------------------------------------------
# Reference + tests
# --------------------------------------------------------------------------------------
def _ref_ffn(x, w1, b1, w2, b2):
    h = x @ w1 + b1
    h = 0.5 * h * (1.0 + jax.lax.erf(h * _INV_SQRT2))
    return h @ w2 + b2


def _make_params(key, hidden_size, ffn_size):
    k1, kb1, k2, kb2 = jax.random.split(key, 4)
    bound1 = 1.0 / math.sqrt(2 * hidden_size)
    w1 = jax.random.uniform(k1, (2 * hidden_size, ffn_size),
                            minval=-bound1, maxval=bound1, dtype=jnp.float32)
    b1 = jax.random.uniform(kb1, (ffn_size,),
                            minval=-bound1, maxval=bound1, dtype=jnp.float32)
    bound2 = 1.0 / math.sqrt(ffn_size)
    w2 = jax.random.uniform(k2, (ffn_size, hidden_size),
                            minval=-bound2, maxval=bound2, dtype=jnp.float32)
    b2 = jax.random.uniform(kb2, (hidden_size,),
                            minval=-bound2, maxval=bound2, dtype=jnp.float32)
    return w1, b1, w2, b2


if __name__ == "__main__":
    key = jax.random.PRNGKey(0)
    kp1, kx1, kp2, kx2, kp3, kx3 = jax.random.split(key, 6)

    # --- Test 1: module-spec small shapes -> whole-F resident path (no scratch) ---
    hidden, ffn = 32, 64
    w1, b1, w2, b2 = _make_params(kp1, hidden, ffn)
    x = jax.random.normal(kx1, (2, 8, 2 * hidden), dtype=jnp.float32)
    out = jax.block_until_ready(feed_forward_network(x, w1, b1, w2, b2))
    ref = _ref_ffn(x, w1, b1, w2, b2)
    assert out.shape == (2, 8, hidden), out.shape
    assert jnp.allclose(out, ref, atol=1e-5, rtol=1e-5), "mismatch (test 1: whole-F path)"

    # --- Test 2: M tiling (grid > 1) + unrolled in-kernel F chunking with acc scratch ---
    hidden, ffn = 128, 512
    w1, b1, w2, b2 = _make_params(kp2, hidden, ffn)
    x = jax.random.normal(kx2, (4, 64, 2 * hidden), dtype=jnp.float32)
    out = jax.block_until_ready(
        feed_forward_network(x, w1, b1, w2, b2, tm=128, max_fk=256))
    ref = _ref_ffn(x, w1, b1, w2, b2)
    assert out.shape == (4, 64, hidden), out.shape
    assert jnp.allclose(out, ref, atol=2e-5, rtol=2e-5), "mismatch (test 2: chunked path)"

    # --- Test 3: F-tiled grid fallback (streamed weights), non-divisible ffn -> padding ---
    hidden, ffn = 128, 640
    w1, b1, w2, b2 = _make_params(kp3, hidden, ffn)
    x = jax.random.normal(kx3, (2, 64, 2 * hidden), dtype=jnp.float32)
    out = jax.block_until_ready(
        feed_forward_network(x, w1, b1, w2, b2, tm=64, tf=256, force_f_tiling=True))
    ref = _ref_ffn(x, w1, b1, w2, b2)
    assert out.shape == (2, 64, hidden), out.shape
    assert jnp.allclose(out, ref, atol=2e-5, rtol=2e-5), "mismatch (test 3: F-tiled path)"

    # --- Test 4: bf16 MXU-operand path (f32 accumulation), loose tolerance vs f32 ref ---
    out = jax.block_until_ready(
        feed_forward_network(x, w1, b1, w2, b2, compute_dtype=jnp.bfloat16))
    assert jnp.allclose(out, ref, atol=5e-2, rtol=5e-2), "mismatch (test 4: bf16 path)"

    print("KERNEL_OK")
</pallas_src>

<mosaic_0001>
module attributes {stable_mosaic.version = 11 : i64} {
  func.func @_ffn_kernel_whole(%arg0: i32, %arg1: memref<16x64xf32, #tpu.memory_space<vmem>>, %arg2: memref<64x64xf32, #tpu.memory_space<vmem>>, %arg3: memref<1x64xf32, #tpu.memory_space<vmem>>, %arg4: memref<64x32xf32, #tpu.memory_space<vmem>>, %arg5: memref<1x32xf32, #tpu.memory_space<vmem>>, %arg6: memref<16x32xf32, #tpu.memory_space<vmem>>) attributes {dimension_semantics = [#tpu.dimension_semantics<parallel>], iteration_bounds = array<i64: 1>, scalar_prefetch = 0 : i64, scratch_operands = 0 : i64, tpu.core_type = #tpu.core_type<tc>, window_params = [{transform_indices = @transform_0, window_bounds = array<i64: 16, 64>}, {pipeline_mode = #tpu.pipeline_mode<synchronous>, transform_indices = @transform_1, window_bounds = array<i64: 64, 64>}, {pipeline_mode = #tpu.pipeline_mode<synchronous>, transform_indices = @transform_2, window_bounds = array<i64: 1, 64>}, {pipeline_mode = #tpu.pipeline_mode<synchronous>, transform_indices = @transform_3, window_bounds = array<i64: 64, 32>}, {pipeline_mode = #tpu.pipeline_mode<synchronous>, transform_indices = @transform_4, window_bounds = array<i64: 1, 32>}, {transform_indices = @transform_5, window_bounds = array<i64: 16, 32>}]} {
    %c0 = arith.constant 0 : index
    %c0_0 = arith.constant 0 : index
    %0 = vector.load %arg1[%c0, %c0_0] : memref<16x64xf32, #tpu.memory_space<vmem>>, vector<16x64xf32>
    %c0_1 = arith.constant 0 : index
    %c0_2 = arith.constant 0 : index
    %1 = vector.load %arg2[%c0_1, %c0_2] : memref<64x64xf32, #tpu.memory_space<vmem>>, vector<64x64xf32>
    %cst = arith.constant dense<0.000000e+00> : vector<16x64xf32>
    %2 = tpu.matmul %0, %1, %cst {dimension_numbers = #tpu.dot_dimension_numbers<[1], [0], [0], [1], [0, 0, 1, 1], [], []>} : vector<16x64xf32>, vector<64x64xf32>, vector<16x64xf32> -> vector<16x64xf32>
    %c0_3 = arith.constant 0 : index
    %c0_4 = arith.constant 0 : index
    %3 = vector.load %arg3[%c0_3, %c0_4] : memref<1x64xf32, #tpu.memory_space<vmem>>, vector<1x64xf32>
    %4 = vector.broadcast %3 : vector<1x64xf32> to vector<16x64xf32>
    %5 = arith.addf %2, %4 : vector<16x64xf32>
    %cst_5 = arith.constant 5.000000e-01 : f32
    %6 = vector.broadcast %cst_5 : f32 to vector<16x64xf32>
    %7 = arith.mulf %6, %5 : vector<16x64xf32>
    %cst_6 = arith.constant 0.707106769 : f32
    %8 = vector.broadcast %cst_6 : f32 to vector<16x64xf32>
    %9 = arith.mulf %5, %8 : vector<16x64xf32>
    %10 = math.erf %9 : vector<16x64xf32>
    %cst_7 = arith.constant 1.000000e+00 : f32
    %11 = vector.broadcast %cst_7 : f32 to vector<16x64xf32>
    %12 = arith.addf %11, %10 : vector<16x64xf32>
    %13 = arith.mulf %7, %12 : vector<16x64xf32>
    %c0_8 = arith.constant 0 : index
    %c0_9 = arith.constant 0 : index
    %14 = vector.load %arg4[%c0_8, %c0_9] : memref<64x32xf32, #tpu.memory_space<vmem>>, vector<64x32xf32>
    %cst_10 = arith.constant dense<0.000000e+00> : vector<16x32xf32>
    %15 = tpu.matmul %13, %14, %cst_10 {dimension_numbers = #tpu.dot_dimension_numbers<[1], [0], [0], [1], [0, 0, 1, 1], [], []>} : vector<16x64xf32>, vector<64x32xf32>, vector<16x32xf32> -> vector<16x32xf32>
    %c0_11 = arith.constant 0 : index
    %c0_12 = arith.constant 0 : index
    %16 = vector.load %arg5[%c0_11, %c0_12] : memref<1x32xf32, #tpu.memory_space<vmem>>, vector<1x32xf32>
    %17 = vector.broadcast %16 : vector<1x32xf32> to vector<16x32xf32>
    %18 = arith.addf %15, %17 : vector<16x32xf32>
    %c0_13 = arith.constant 0 : index
    %c0_14 = arith.constant 0 : index
    %19 = vector.load %arg6[%c0_13, %c0_14] : memref<16x32xf32, #tpu.memory_space<vmem>>, vector<16x32xf32>
    tpu.vector_store %arg6[%c0_13, %c0_14], %18 {strides = array<i32>} : memref<16x32xf32, #tpu.memory_space<vmem>>, vector<16x32xf32>,
    return
  }
  func.func @transform_0(%arg0: i32) -> (i32, i32) {
    %c0_i32 = arith.constant 0 : i32
    %c0_i32_0 = arith.constant 0 : i32
    return %arg0, %c0_i32 : i32, i32
  }
  func.func @transform_1(%arg0: i32) -> (i32, i32) {
    %c0_i32 = arith.constant 0 : i32
    %c0_i32_0 = arith.constant 0 : i32
    %c0_i32_1 = arith.constant 0 : i32
    return %c0_i32, %c0_i32_0 : i32, i32
  }
  func.func @transform_2(%arg0: i32) -> (i32, i32) {
    %c0_i32 = arith.constant 0 : i32
    %c0_i32_0 = arith.constant 0 : i32
    %c0_i32_1 = arith.constant 0 : i32
    return %c0_i32, %c0_i32_0 : i32, i32
  }
  func.func @transform_3(%arg0: i32) -> (i32, i32) {
    %c0_i32 = arith.constant 0 : i32
    %c0_i32_0 = arith.constant 0 : i32
    %c0_i32_1 = arith.constant 0 : i32
    return %c0_i32, %c0_i32_0 : i32, i32
  }
  func.func @transform_4(%arg0: i32) -> (i32, i32) {
    %c0_i32 = arith.constant 0 : i32
    %c0_i32_0 = arith.constant 0 : i32
    %c0_i32_1 = arith.constant 0 : i32
    return %c0_i32, %c0_i32_0 : i32, i32
  }
  func.func @transform_5(%arg0: i32) -> (i32, i32) {
    %c0_i32 = arith.constant 0 : i32
    %c0_i32_0 = arith.constant 0 : i32
    return %arg0, %c0_i32 : i32, i32
  }
}

</mosaic_0001>

<llo_original>
// kernel: feed_forward_network.1
$region0: #{feed_forward_network.1}
  #allocation0 [shape = 'u32[]', space=smem, size = 0x4, offset = 0x4, fixed_abs, tag = 'smem constant byte address 0x4 - core index']
  #allocation1 [shape = 'u32[72,128]{1,0:T(1,128)}', space=vmem, size = 0x9000, scoped, tag = 'internal scratch']
  %s0 = inlined_call_operand.vmem [shape: f32[16,64], index: 0, kind: input, shape index: {}]
  %s1 = inlined_call_operand.vmem [shape: f32[64,64], index: 1, kind: input, shape index: {}]
  %s2 = inlined_call_operand.vmem [shape: f32[1,64], index: 2, kind: input, shape index: {}]
  %s3 = inlined_call_operand.vmem [shape: f32[64,32], index: 3, kind: input, shape index: {}]
  %s4 = inlined_call_operand.vmem [shape: f32[1,32], index: 4, kind: input, shape index: {}]
  %s5 = inlined_call_operand.hbm [shape: f32[16,32], index: 5, kind: output, shape index: {}]
  %s6 = sld [smem:[#allocation0]]
  $region30: #{feed_forward_network.1} parent=0
    _
  %s8 = ssub.s32 1, %s6
  %s9 = scalar_select 0, %s8, %s6
  $region1: #{feed_forward_network.1} parent=0
    #allocation2 [shape = 'u8[8192]{0}', space=vmem, size = 0x2000, scoped, tag = 'output window, operand 0, single buffered']
    #allocation3 [shape = 's32[1]{0}', space=sflag, size = 0x4, scoped, tag = 'scoped memory for feed_forward_network.1']
    %10 = vsyncpa [#allocation3], 0
    // Predicated region
    $region2: #{feed_forward_network.1} parent=1 // pred_check
      _
    $region3: #{feed_forward_network.1} parent=1 // pred_check_branch
      %12 = sbr.rel (0) target = $region5
    $region4: #{feed_forward_network.1} parent=1 // pred_region
      _
    $region5: #{feed_forward_network.1} parent=1 // pred_fallthru
      _
    // Predicated region
    $region6: #{feed_forward_network.1} parent=1 // pred_check
      _
    $region7: #{feed_forward_network.1} parent=1 // pred_check_branch
      %14 = sbr.rel (0) target = $region9
    $region8: #{feed_forward_network.1} parent=1 // pred_region
      _
    $region9: #{feed_forward_network.1} parent=1 // pred_fallthru
      _
    // Predicated region
    $region10: #{feed_forward_network.1} parent=1 // pred_check
      _
    $region11: #{feed_forward_network.1} parent=1 // pred_check_branch
      %16 = sbr.rel (0) target = $region13
    $region12: #{feed_forward_network.1} parent=1 // pred_region
      _
    $region13: #{feed_forward_network.1} parent=1 // pred_fallthru
      _
    // Predicated region
    $region14: #{feed_forward_network.1} parent=1 // pred_check
      _
    $region15: #{feed_forward_network.1} parent=1 // pred_check_branch
      %18 = sbr.rel (0) target = $region17
    $region16: #{feed_forward_network.1} parent=1 // pred_region
      _
    $region17: #{feed_forward_network.1} parent=1 // pred_fallthru
      _
    // Predicated region
    $region18: #{feed_forward_network.1} parent=1 // pred_check
      _
    $region19: #{feed_forward_network.1} parent=1 // pred_check_branch
      %20 = sbr.rel (0) target = $region21
    $region20: #{feed_forward_network.1} parent=1 // pred_region
      _
    $region21: #{feed_forward_network.1} parent=1 // pred_fallthru
      _
    %v21 = vld [vmem:[%s0] sm:$0xff]
    %v22 = vld [vmem:[%s0 + $0x8] sm:$0xff]
    %v23 = vld [vmem:[%s1] sm:$0xff]
    %v24 = vld [vmem:[%s1 + $0x8] sm:$0xff]
    %v25 = vld [vmem:[%s1 + $0x10] sm:$0xff]
    %v26 = vld [vmem:[%s1 + $0x18] sm:$0xff]
    %v27 = vld [vmem:[%s1 + $0x20] sm:$0xff]
    %v28 = vld [vmem:[%s1 + $0x28] sm:$0xff]
    %v29 = vld [vmem:[%s1 + $0x30] sm:$0xff]
    %v30 = vld [vmem:[%s1 + $0x38] sm:$0xff]
    %v31 = vld [vmem:[%s2] sm:$0x1]
    %v33 = vperm.slane %v31, 0
    %vm35 = vcmask 523264
    %v37 = vsel %vm35, %v21, 0
    %v40 = vsel %vm35, %v22, 0
    %42 = vmatpush.msra.mxu0 0.0
    %43 = vmatpush.msra.mxu0 0.0
    %44 = vmatpush.msra.mxu0 0.0
    %45 = vmatpush.msra.mxu0 0.0
    %46 = vmatpush.msra.mxu0 0.0
    %47 = vmatpush.msra.mxu0 0.0
    %48 = vmatpush.msra.mxu0 0.0
    %49 = vmatpush.msra.mxu0 0.0
    %50 = vmatpush.msra.mxu0 %v30
    %51 = vmatpush.msra.mxu0 %v29
    %52 = vmatpush.msra.mxu0 %v28
    %53 = vmatpush.msra.mxu0 %v27
    %54 = vmatpush.msra.mxu0 %v26
    %55 = vmatpush.msra.mxu0 %v25
    %56 = vmatpush.msra.mxu0 %v24
    %57 = vmatpush.msra.mxu0 %v23
    %58 = vmatmul.f32.gmra.mxu0 %v37
    %v59 = vpop.f32.mrf.mxu0
    %v60 = vadd.f32 %v33, %v59
    %61 = vmatmul.f32.gmra.mxu0 %v40
    %v62 = vpop.f32.mrf.mxu0
    %v63 = vadd.f32 %v33, %v62
    %64 = vdwg.mxu0
    %v65 = vmul.f32 %v60, 0.5
    %v66 = vmul.f32 %v63, 0.5
    %v67 = vmul.f32 %v60, 0.70710677
    %v68 = vmul.f32 %v63, 0.70710677
    %v69 = vmul.f32 %v67, %v67
    %v70 = vmin.f32 16.0, %v69
    %v71 = vmul.f32 %v70, 2.1237322e-06
    %v72 = vadd.f32 %v71, 0.00028619796
    %v73 = vmul.f32 %v70, %v72
    %v74 = vadd.f32 %v73, 0.0036580483
    %v75 = vmul.f32 %v70, %v74
    %v76 = vadd.f32 %v75, 0.05243302
    %v77 = vmul.f32 %v70, %v76
    %v78 = vadd.f32 %v77, 0.18741608
    %v79 = vmul.f32 %v70, %v78
    %v80 = vadd.f32 %v79, 1.1283791
    %v81 = vmul.f32 %v67, %v80
    %v82 = vmul.f32 %v70, 3.8918573e-05
    %v83 = vadd.f32 %v82, 0.001143296
    %v84 = vmul.f32 %v70, %v83
    %v85 = vadd.f32 %v84, 0.014752088
    %v86 = vmul.f32 %v70, %v85
    %v87 = vadd.f32 %v86, 0.112945676
    %v88 = vmul.f32 %v70, %v87
    %v89 = vadd.f32 %v88, 0.4994258
    %v90 = vmul.f32 %v70, %v89
    %v91 = vadd.f32 %v90, 1.0
    %v92 = vrcp.pop %v91
    %v93 = vmul.f32 %v91, %v92
    %v94 = vsub.f32 1.0, %v93
    %v95 = vmul.f32 %v92, %v94
    %v96 = vadd.f32 %v92, %v95
    %vm97 = vweird.f32 %v91
    %vm98 = vweird.f32 %v92
    %vm99 = vmor %vm97, %vm98
    %v100 = vsel %vm99, %v92, %v96
    %v101 = vand.u32 2147483647, %v91
    %vm102 = vcmp.eq.f32.partialorder %v101, 8.507059e+37
    %v103 = vand.u32 %v91, 2147483648
    %v104 = vor.u32 1.1754944e-38, %v103
    %v105 = vsel %vm102, %v104, %v100
    %v106 = vmul.f32 %v81, %v105
    %v107 = vmin.f32 %v106, 1.0
    %v108 = vmax.f32 %v107, -1.0
    %v109 = vmul.f32 %v68, %v68
    %v110 = vmin.f32 16.0, %v109
    %v111 = vmul.f32 %v110, 2.1237322e-06
    %v112 = vadd.f32 %v111, 0.00028619796
    %v113 = vmul.f32 %v110, %v112
    %v114 = vadd.f32 %v113, 0.0036580483
    %v115 = vmul.f32 %v110, %v114
    %v116 = vadd.f32 %v115, 0.05243302
    %v117 = vmul.f32 %v110, %v116
    %v118 = vadd.f32 %v117, 0.18741608
    %v119 = vmul.f32 %v110, %v118
    %v120 = vadd.f32 %v119, 1.1283791
    %v121 = vmul.f32 %v68, %v120
    %v122 = vmul.f32 %v110, 3.8918573e-05
    %v123 = vadd.f32 %v122, 0.001143296
    %v124 = vmul.f32 %v110, %v123
    %v125 = vadd.f32 %v124, 0.014752088
    %v126 = vmul.f32 %v110, %v125
    %v127 = vadd.f32 %v126, 0.112945676
    %v128 = vmul.f32 %v110, %v127
    %v129 = vadd.f32 %v128, 0.4994258
    %v130 = vmul.f32 %v110, %v129
    %v131 = vadd.f32 %v130, 1.0
    %v132 = vrcp.pop %v131
    %v133 = vmul.f32 %v131, %v132
    %v134 = vsub.f32 1.0, %v133
    %v135 = vmul.f32 %v132, %v134
    %v136 = vadd.f32 %v132, %v135
    %vm137 = vweird.f32 %v131
    %vm138 = vweird.f32 %v132
    %vm139 = vmor %vm137, %vm138
    %v140 = vsel %vm139, %v132, %v136
    %v141 = vand.u32 2147483647, %v131
    %vm142 = vcmp.eq.f32.partialorder %v141, 8.507059e+37
    %v143 = vand.u32 %v131, 2147483648
    %v144 = vor.u32 1.1754944e-38, %v143
    %v145 = vsel %vm142, %v144, %v140
    %v146 = vmul.f32 %v121, %v145
    %v147 = vmin.f32 %v146, 1.0
    %v148 = vmax.f32 %v147, -1.0
    %v149 = vadd.f32 %v108, 1.0
    %v150 = vadd.f32 %v148, 1.0
    %v151 = vmul.f32 %v65, %v149
    %v152 = vmul.f32 %v66, %v150
    %v153 = vld [vmem:[%s3] sm:$0xff]
    %v154 = vld [vmem:[%s3 + $0x8] sm:$0xff]
    %v155 = vld [vmem:[%s3 + $0x10] sm:$0xff]
    %v156 = vld [vmem:[%s3 + $0x18] sm:$0xff]
    %v157 = vld [vmem:[%s3 + $0x20] sm:$0xff]
    %v158 = vld [vmem:[%s3 + $0x28] sm:$0xff]
    %v159 = vld [vmem:[%s3 + $0x30] sm:$0xff]
    %v160 = vld [vmem:[%s3 + $0x38] sm:$0xff]
    %v161 = vld [vmem:[%s4] sm:$0x1]
    %v163 = vperm.slane %v161, 0
    %v166 = vsel %vm35, %v151, 0
    %v169 = vsel %vm35, %v152, 0
    %171 = vmatpush.msra.mxu0 0.0
    %172 = vmatpush.msra.mxu0 0.0
    %173 = vmatpush.msra.mxu0 0.0
    %174 = vmatpush.msra.mxu0 0.0
    %175 = vmatpush.msra.mxu0 0.0
    %176 = vmatpush.msra.mxu0 0.0
    %177 = vmatpush.msra.mxu0 0.0
    %178 = vmatpush.msra.mxu0 0.0
    %179 = vmatpush.msra.mxu0 %v160
    %180 = vmatpush.msra.mxu0 %v159
    %181 = vmatpush.msra.mxu0 %v158
    %182 = vmatpush.msra.mxu0 %v157
    %183 = vmatpush.msra.mxu0 %v156
    %184 = vmatpush.msra.mxu0 %v155
    %185 = vmatpush.msra.mxu0 %v154
    %186 = vmatpush.msra.mxu0 %v153
    %187 = vmatmul.f32.gmra.mxu0 %v166
    %v188 = vpop.f32.mrf.mxu0
    %v189 = vadd.f32 %v163, %v188
    %190 = vmatmul.f32.gmra.mxu0 %v169
    %v191 = vpop.f32.mrf.mxu0
    %v192 = vadd.f32 %v163, %v191
    %193 = vdwg.mxu0
    %vm194 = vcmask 261120
    %195 = vst.msk [vmem:[#allocation2] sm:$0xff] %vm194, %v189
    %196 = vst.msk [vmem:[#allocation2 + $0x8] sm:$0xff] %vm194, %v192
    // Predicated region
    $region22: #{feed_forward_network.1} parent=1 // pred_check
      _
    $region23: #{feed_forward_network.1} parent=1 // pred_check_branch
      %198 = sbr.rel (0) target = $region25
    $region24: #{feed_forward_network.1} parent=1 // pred_region
      %200 = vsyncadd [#allocation3], 0
      %s201 = sshll.u32 [#allocation2], 4
      %s202 = int_to_ptr.vmem [resolvable:$true] %s201
      %s203 = sshll.u32 %s5, 4
      %s204 = int_to_ptr.hbm [resolvable:$true] %s203
      %209 = dma.vmem_to_hbm [thread:$0]  %s202, 256, %s204, [#allocation3], 128, 128, 8
    $region25: #{feed_forward_network.1} parent=1 // pred_fallthru
      _
    // Predicated region
    $region26: #{feed_forward_network.1} parent=1 // pred_check
      _
    $region27: #{feed_forward_network.1} parent=1 // pred_check_branch
      %211 = sbr.rel (0) target = $region29
    $region28: #{feed_forward_network.1} parent=1 // pred_region
      %213 = dma.done [#allocation3], 256
    $region29: #{feed_forward_network.1} parent=1 // pred_fallthru
      _
    %214 = vsyncpa [#allocation3], 1

</llo_original>
